<compile_context>
chip_gen: v5e
topology: v5e:2x2
jax: 0.10.0
libtpu: 0.0.40
codegen_flags: <defaults>
</compile_context>

<pallas_src>
import functools

import jax
import jax.numpy as jnp
from jax.experimental import pallas as pl
from jax.experimental.pallas import tpu as pltpu

LAYER_NORM_EPS = 1e-12
_MIN_ROW_TILE = 16        # bf16 sublane-packed tile height
_LANE = 128


def _round_up(x, m):
    return ((x + m - 1) // m) * m


def _cdiv(a, b):
    return (a + b - 1) // b


def _vmem_capacity_bytes():
    try:
        return int(pltpu.get_tpu_info().vmem_capacity_bytes)
    except Exception:
        return 64 * 1024 * 1024   # conservative fallback: v7x per-TC VMEM


def _est_vmem_bytes(tm, H, tn, k_tiles, *, single_buffer_weights):
    """Rough peak-VMEM model for the pipelined kernel (bf16 compute + bf16 output)."""
    cdt = 2  # bf16
    wbuf = 1 if single_buffer_weights else 2
    w2buf = wbuf if k_tiles == 1 else 2
    b = 0
    b += 2 * tm * H * cdt                     # x tile, double-buffered
    b += 2 * tm * tn * cdt                    # out tile, double-buffered (bf16 store)
    b += wbuf * H * H * cdt                   # W1 residency
    b += w2buf * H * tn * cdt                 # W2 residency (one column block)
    b += (3 * wbuf * H + w2buf * tn) * 8 * 4  # bias / LN rows (f32, sublane-padded)
    b += tm * H * cdt                         # cached post-LN activations (scratch)
    b += 2 * tm * H * 4                       # f32 intermediates inside the body
    return b


def _head_kernel(x_ref, w1_ref, b1_ref, g_ref, beta_ref, w2_ref, b2_ref,
                 o_ref, h_ref, *, approximate_gelu):
    # Grid = (row tiles [parallel], decoder column tiles [arbitrary]).
    # x_ref: (tm,H) bf16; w1_ref: (H,H) bf16; b1/g/beta: (1,H) f32
    # w2_ref: (H,tn) bf16; b2_ref: (1,tn) f32; o_ref: (tm,tn) bf16
    # h_ref: (tm,H) bf16 scratch carrying post-LN activations across column tiles.
    j = pl.program_id(1)

    @pl.when(j == 0)
    def _():
        # transform.dense: bf16 x bf16 on the MXU, f32 accumulate.
        h = jnp.dot(x_ref[...], w1_ref[...], preferred_element_type=jnp.float32)
        h = h + b1_ref[...]
        # transform_act_fn: tanh GELU keeps the transcendental on the EUP slot.
        h = jax.nn.gelu(h, approximate=approximate_gelu)
        # LayerNorm, single sweep: E[x] and E[x^2] together, var clamped >= 0.
        mu = jnp.mean(h, axis=-1, keepdims=True)
        m2 = jnp.mean(h * h, axis=-1, keepdims=True)
        var = jnp.maximum(m2 - mu * mu, 0.0)
        h = (h - mu) * jax.lax.rsqrt(var + LAYER_NORM_EPS)
        h = h * g_ref[...] + beta_ref[...]
        h_ref[...] = h.astype(h_ref.dtype)   # bf16: exactly what the MXU consumes next

    # decoder: stream W2 column blocks against the cached activations.
    out = jnp.dot(h_ref[...], w2_ref[...], preferred_element_type=jnp.float32)
    out = out + b2_ref[...]
    o_ref[...] = out.astype(o_ref.dtype)


@functools.partial(
    jax.jit,
    static_argnames=("tm_max", "compute_dtype", "approximate_gelu",
                     "single_buffer_weights"))
def bert_image_prediction_head(hidden_states, params, *, tm_max=None,
                               compute_dtype=jnp.bfloat16,
                               approximate_gelu=True,
                               single_buffer_weights=True):
    """hidden_states: [B, S, H] -> [B, S, K]."""
    B, S, H = hidden_states.shape
    K = params["w2"].shape[1]
    rows = B * S

    # ---- decoder-column tiling: lane-dense output, VMEM flat in K ------------
    tn = 512 if K > 512 else _round_up(K, _LANE)
    k_pad = _round_up(K, tn)
    k_tiles = k_pad // tn

    # ---- per-generation VMEM budget & max row tile ----------------------------
    vmem_cap = _vmem_capacity_bytes()
    budget = min(int(vmem_cap * 0.75), 100 * 1024 * 1024)
    if tm_max is None:
        tm_max = _MIN_ROW_TILE
        for cand in (1024, 512, 256, 128, 64, 32, 16):
            if _est_vmem_bytes(cand, H, tn, k_tiles,
                               single_buffer_weights=single_buffer_weights) <= budget:
                tm_max = cand
                break
    est = _est_vmem_bytes(tm_max, H, tn, k_tiles,
                          single_buffer_weights=single_buffer_weights)
    vmem_limit = min(max(budget, int(1.25 * est)), int(vmem_cap * 0.98))

    # ---- row tiling: balance pad waste; >= 2 tiles so v7x's 2nd TC gets work --
    min_tiles = 2 if rows >= 2 * _MIN_ROW_TILE else 1
    num_tiles = max(_cdiv(rows, tm_max), min_tiles)
    tm_eff = _round_up(_cdiv(rows, num_tiles), _MIN_ROW_TILE)
    rows_pad = _round_up(rows, tm_eff)
    row_tiles = rows_pad // tm_eff

    x2d = hidden_states.reshape(rows, H).astype(compute_dtype)
    if rows_pad != rows:
        # Zero-padded rows flow through GELU/LN (finite values) and are sliced off
        # below; they never mix with real rows.
        x2d = jnp.pad(x2d, ((0, rows_pad - rows), (0, 0)))

    w1 = params["w1"].astype(compute_dtype)                  # (H, H)  [in, out]
    b1 = params["b1"].reshape(1, H).astype(jnp.float32)
    gamma = params["gamma"].reshape(1, H).astype(jnp.float32)
    beta = params["beta"].reshape(1, H).astype(jnp.float32)
    w2 = params["w2"].astype(compute_dtype)                  # (H, K)  [in, out]
    b2 = params["b2"].reshape(1, K).astype(jnp.float32)
    if k_pad != K:
        w2 = jnp.pad(w2, ((0, 0), (0, k_pad - K)))
        b2 = jnp.pad(b2, ((0, 0), (0, k_pad - K)))

    def _wspec(shape, index_map, single_buffer):
        # Single-buffer blocks whose block index never changes across the grid.
        if single_buffer:
            return pl.BlockSpec(shape, index_map, pipeline_mode=pl.Buffered(1))
        return pl.BlockSpec(shape, index_map)

    inv = single_buffer_weights
    w2_inv = single_buffer_weights and (k_tiles == 1)

    kernel = functools.partial(_head_kernel, approximate_gelu=approximate_gelu)
    out2d = pl.pallas_call(
        kernel,
        out_shape=jax.ShapeDtypeStruct((rows_pad, k_pad), compute_dtype),
        grid_spec=pltpu.PrefetchScalarGridSpec(
            num_scalar_prefetch=0,
            grid=(row_tiles, k_tiles),
            in_specs=[
                pl.BlockSpec((tm_eff, H), lambda i, j: (i, 0)),   # x (streamed rows)
                _wspec((H, H), lambda i, j: (0, 0), inv),         # W1
                _wspec((1, H), lambda i, j: (0, 0), inv),         # b1
                _wspec((1, H), lambda i, j: (0, 0), inv),         # LN gamma
                _wspec((1, H), lambda i, j: (0, 0), inv),         # LN beta
                _wspec((H, tn), lambda i, j: (0, j), w2_inv),     # W2 column block
                _wspec((1, tn), lambda i, j: (0, j), w2_inv),     # b2 column block
            ],
            out_specs=pl.BlockSpec((tm_eff, tn), lambda i, j: (i, j)),
            scratch_shapes=[pltpu.VMEM((tm_eff, H), compute_dtype)],
        ),
        compiler_params=pltpu.CompilerParams(
            dimension_semantics=("parallel", "arbitrary"),
            vmem_limit_bytes=int(vmem_limit),
        ),
    )(x2d, w1, b1, gamma, beta, w2, b2)

    out = out2d[:rows, :K].reshape(B, S, K)
    return out.astype(hidden_states.dtype)


def init_params(key, hidden_size, out_dim, param_dtype=jnp.bfloat16):
    """Deterministic synthetic parameter init (shapes match the nn.Module layers)."""
    k1, k2, k3, k4 = jax.random.split(key, 4)
    scale = 0.02
    return {
        # dense: nn.Linear(H, H) — stored pre-transposed as (in, out)
        "w1": (scale * jax.random.normal(k1, (hidden_size, hidden_size))).astype(param_dtype),
        "b1": (scale * jax.random.normal(k2, (hidden_size,))).astype(jnp.float32),
        # LayerNorm(H)
        "gamma": jnp.ones((hidden_size,), jnp.float32),
        "beta": jnp.zeros((hidden_size,), jnp.float32),
        # decoder: nn.Linear(H, K) — stored pre-transposed as (in, out)
        "w2": (scale * jax.random.normal(k3, (hidden_size, out_dim))).astype(param_dtype),
        "b2": (scale * jax.random.normal(k4, (out_dim,))).astype(jnp.float32),
    }


def _reference(hidden_states, params, compute_dtype=jnp.bfloat16, approximate_gelu=True):
    """Pure-JAX reference mirroring the kernel's bf16-in / f32-accumulate numerics."""
    x = hidden_states.astype(compute_dtype).astype(jnp.float32)
    w1 = params["w1"].astype(compute_dtype).astype(jnp.float32)
    w2 = params["w2"].astype(compute_dtype).astype(jnp.float32)
    h = x @ w1 + params["b1"].astype(jnp.float32)
    h = jax.nn.gelu(h, approximate=approximate_gelu)
    mu = jnp.mean(h, axis=-1, keepdims=True)
    var = jnp.mean(jnp.square(h - mu), axis=-1, keepdims=True)
    h = (h - mu) * jax.lax.rsqrt(var + LAYER_NORM_EPS)
    h = h * params["gamma"].astype(jnp.float32) + params["beta"].astype(jnp.float32)
    h = h.astype(compute_dtype).astype(jnp.float32)
    out = h @ w2 + params["b2"].astype(jnp.float32)
    out = out.astype(compute_dtype)            # kernel stores bf16
    return out.astype(hidden_states.dtype)


if __name__ == "__main__":
    # Small shapes: batch=2, num_regions (seq)=8, hidden=32, out_dim=16.
    # TODO(synk): the full ROIBertEncoder forward (HF BERT self-attention stack,
    # CNN visual encoder, embedding tables, attention-mask assembly, pooler) has no
    # clean single-Pallas-kernel equivalent; only the fused dense->GELU->LayerNorm->dense
    # projection block is implemented here.
    B, S, H, K = 2, 8, 32, 16

    key = jax.random.PRNGKey(0)
    kx, kp = jax.random.split(key)
    hidden_states = jax.random.normal(kx, (B, S, H), dtype=jnp.float32)
    params = init_params(kp, H, K)

    try:
        out = bert_image_prediction_head(hidden_states, params,
                                         single_buffer_weights=True)
        out = jax.block_until_ready(out)
    except Exception:
        # Fallback for JAX builds that reject BlockSpec(pipeline_mode=pl.Buffered(1)).
        out = bert_image_prediction_head(hidden_states, params,
                                         single_buffer_weights=False)
        out = jax.block_until_ready(out)

    assert out.shape == (B, S, K)

    # Tight check vs. a reference with matched numerics (tanh GELU, bf16 store).
    ref_matched = _reference(hidden_states, params, approximate_gelu=True)
    assert jnp.allclose(out, ref_matched, atol=5e-3, rtol=5e-3), "mismatch vs matched reference"

    # Looser check vs. the module-faithful exact (erf) GELU reference, bounding the
    # error introduced by the tanh approximation.
    ref_exact = _reference(hidden_states, params, approximate_gelu=False)
    assert jnp.allclose(out, ref_exact, atol=1e-2, rtol=1e-2), "mismatch vs erf-GELU reference"

    print("KERNEL_OK")
</pallas_src>

<mosaic_0001>
module attributes {stable_mosaic.version = 11 : i64} {
  func.func @_head_kernel(%arg0: i32, %arg1: i32, %arg2: memref<16x32xbf16, #tpu.memory_space<vmem>>, %arg3: memref<32x32xbf16, #tpu.memory_space<vmem>>, %arg4: memref<1x32xf32, #tpu.memory_space<vmem>>, %arg5: memref<1x32xf32, #tpu.memory_space<vmem>>, %arg6: memref<1x32xf32, #tpu.memory_space<vmem>>, %arg7: memref<32x128xbf16, #tpu.memory_space<vmem>>, %arg8: memref<1x128xf32, #tpu.memory_space<vmem>>, %arg9: memref<16x128xbf16, #tpu.memory_space<vmem>>, %arg10: memref<16x32xbf16, #tpu.memory_space<vmem>>) attributes {dimension_semantics = [#tpu.dimension_semantics<parallel>, #tpu.dimension_semantics<arbitrary>], iteration_bounds = array<i64: 1, 1>, scalar_prefetch = 0 : i64, scratch_operands = 1 : i64, tpu.core_type = #tpu.core_type<tc>, window_params = [{transform_indices = @transform_0, window_bounds = array<i64: 16, 32>}, {pipeline_mode = #tpu.pipeline_mode<synchronous>, transform_indices = @transform_1, window_bounds = array<i64: 32, 32>}, {pipeline_mode = #tpu.pipeline_mode<synchronous>, transform_indices = @transform_2, window_bounds = array<i64: 1, 32>}, {pipeline_mode = #tpu.pipeline_mode<synchronous>, transform_indices = @transform_3, window_bounds = array<i64: 1, 32>}, {pipeline_mode = #tpu.pipeline_mode<synchronous>, transform_indices = @transform_4, window_bounds = array<i64: 1, 32>}, {pipeline_mode = #tpu.pipeline_mode<synchronous>, transform_indices = @transform_5, window_bounds = array<i64: 32, 128>}, {pipeline_mode = #tpu.pipeline_mode<synchronous>, transform_indices = @transform_6, window_bounds = array<i64: 1, 128>}, {transform_indices = @transform_7, window_bounds = array<i64: 16, 128>}]} {
    %c0_i32 = arith.constant 0 : i32
    %0 = arith.cmpi eq, %arg1, %c0_i32 : i32
    %1 = arith.extui %0 : i1 to i32
    %c0_i32_0 = arith.constant 0 : i32
    %2 = arith.cmpi ne, %1, %c0_i32_0 : i32
    scf.if %2 {
      %c0_8 = arith.constant 0 : index
      %c0_9 = arith.constant 0 : index
      %11 = vector.load %arg2[%c0_8, %c0_9] : memref<16x32xbf16, #tpu.memory_space<vmem>>, vector<16x32xbf16>
      %c0_10 = arith.constant 0 : index
      %c0_11 = arith.constant 0 : index
      %12 = vector.load %arg3[%c0_10, %c0_11] : memref<32x32xbf16, #tpu.memory_space<vmem>>, vector<32x32xbf16>
      %cst_12 = arith.constant dense<0.000000e+00> : vector<16x32xf32>
      %13 = tpu.matmul %11, %12, %cst_12 {dimension_numbers = #tpu.dot_dimension_numbers<[1], [0], [0], [1], [0, 0, 1, 1], [], []>} : vector<16x32xbf16>, vector<32x32xbf16>, vector<16x32xf32> -> vector<16x32xf32>
      %c0_13 = arith.constant 0 : index
      %c0_14 = arith.constant 0 : index
      %14 = vector.load %arg4[%c0_13, %c0_14] : memref<1x32xf32, #tpu.memory_space<vmem>>, vector<1x32xf32>
      %15 = vector.broadcast %14 : vector<1x32xf32> to vector<16x32xf32>
      %16 = arith.addf %13, %15 : vector<16x32xf32>
      %17 = arith.mulf %16, %16 : vector<16x32xf32>
      %18 = arith.mulf %16, %17 : vector<16x32xf32>
      %cst_15 = arith.constant 4.471500e-02 : f32
      %19 = vector.broadcast %cst_15 : f32 to vector<16x32xf32>
      %20 = arith.mulf %19, %18 : vector<16x32xf32>
      %21 = arith.addf %16, %20 : vector<16x32xf32>
      %cst_16 = arith.constant 0.797884583 : f32
      %22 = vector.broadcast %cst_16 : f32 to vector<16x32xf32>
      %23 = arith.mulf %22, %21 : vector<16x32xf32>
      %24 = math.tanh %23 : vector<16x32xf32>
      %cst_17 = arith.constant 1.000000e+00 : f32
      %25 = vector.broadcast %cst_17 : f32 to vector<16x32xf32>
      %26 = arith.addf %25, %24 : vector<16x32xf32>
      %cst_18 = arith.constant 5.000000e-01 : f32
      %27 = vector.broadcast %cst_18 : f32 to vector<16x32xf32>
      %28 = arith.mulf %27, %26 : vector<16x32xf32>
      %29 = arith.mulf %16, %28 : vector<16x32xf32>
      %cst_19 = arith.constant dense<0.000000e+00> : vector<16xf32>
      %30 = vector.multi_reduction <add>, %29, %cst_19 [1] : vector<16x32xf32> to vector<16xf32>
      %31 = vector.shape_cast %30 : vector<16xf32> to vector<16x1xf32>
      %cst_20 = arith.constant 3.200000e+01 : f32
      %32 = vector.broadcast %cst_20 : f32 to vector<16x1xf32>
      %33 = arith.divf %31, %32 : vector<16x1xf32>
      %34 = arith.mulf %29, %29 : vector<16x32xf32>
      %cst_21 = arith.constant dense<0.000000e+00> : vector<16xf32>
      %35 = vector.multi_reduction <add>, %34, %cst_21 [1] : vector<16x32xf32> to vector<16xf32>
      %36 = vector.shape_cast %35 : vector<16xf32> to vector<16x1xf32>
      %cst_22 = arith.constant 3.200000e+01 : f32
      %37 = vector.broadcast %cst_22 : f32 to vector<16x1xf32>
      %38 = arith.divf %36, %37 : vector<16x1xf32>
      %39 = arith.mulf %33, %33 : vector<16x1xf32>
      %40 = arith.subf %38, %39 : vector<16x1xf32>
      %cst_23 = arith.constant 0.000000e+00 : f32
      %41 = vector.broadcast %cst_23 : f32 to vector<16x1xf32>
      %42 = arith.maximumf %40, %41 : vector<16x1xf32>
      %43 = vector.broadcast %33 : vector<16x1xf32> to vector<16x32xf32>
      %44 = arith.subf %29, %43 : vector<16x32xf32>
      %cst_24 = arith.constant 9.99999996E-13 : f32
      %45 = vector.broadcast %cst_24 : f32 to vector<16x1xf32>
      %46 = arith.addf %42, %45 : vector<16x1xf32>
      %47 = math.rsqrt %46 : vector<16x1xf32>
      %48 = vector.broadcast %47 : vector<16x1xf32> to vector<16x32xf32>
      %49 = arith.mulf %44, %48 : vector<16x32xf32>
      %c0_25 = arith.constant 0 : index
      %c0_26 = arith.constant 0 : index
      %50 = vector.load %arg5[%c0_25, %c0_26] : memref<1x32xf32, #tpu.memory_space<vmem>>, vector<1x32xf32>
      %51 = vector.broadcast %50 : vector<1x32xf32> to vector<16x32xf32>
      %52 = arith.mulf %49, %51 : vector<16x32xf32>
      %c0_27 = arith.constant 0 : index
      %c0_28 = arith.constant 0 : index
      %53 = vector.load %arg6[%c0_27, %c0_28] : memref<1x32xf32, #tpu.memory_space<vmem>>, vector<1x32xf32>
      %54 = vector.broadcast %53 : vector<1x32xf32> to vector<16x32xf32>
      %55 = arith.addf %52, %54 : vector<16x32xf32>
      %56 = arith.truncf %55 : vector<16x32xf32> to vector<16x32xbf16>
      %c0_29 = arith.constant 0 : index
      %c0_30 = arith.constant 0 : index
      %57 = vector.load %arg10[%c0_29, %c0_30] : memref<16x32xbf16, #tpu.memory_space<vmem>>, vector<16x32xbf16>
      tpu.vector_store %arg10[%c0_29, %c0_30], %56 {strides = array<i32>} : memref<16x32xbf16, #tpu.memory_space<vmem>>, vector<16x32xbf16>,
    } else {
    }
    %c0 = arith.constant 0 : index
    %c0_1 = arith.constant 0 : index
    %3 = vector.load %arg10[%c0, %c0_1] : memref<16x32xbf16, #tpu.memory_space<vmem>>, vector<16x32xbf16>
    %c0_2 = arith.constant 0 : index
    %c0_3 = arith.constant 0 : index
    %4 = vector.load %arg7[%c0_2, %c0_3] : memref<32x128xbf16, #tpu.memory_space<vmem>>, vector<32x128xbf16>
    %cst = arith.constant dense<0.000000e+00> : vector<16x128xf32>
    %5 = tpu.matmul %3, %4, %cst {dimension_numbers = #tpu.dot_dimension_numbers<[1], [0], [0], [1], [0, 0, 1, 1], [], []>} : vector<16x32xbf16>, vector<32x128xbf16>, vector<16x128xf32> -> vector<16x128xf32>
    %c0_4 = arith.constant 0 : index
    %c0_5 = arith.constant 0 : index
    %6 = vector.load %arg8[%c0_4, %c0_5] : memref<1x128xf32, #tpu.memory_space<vmem>>, vector<1x128xf32>
    %7 = vector.broadcast %6 : vector<1x128xf32> to vector<16x128xf32>
    %8 = arith.addf %5, %7 : vector<16x128xf32>
    %9 = arith.truncf %8 : vector<16x128xf32> to vector<16x128xbf16>
    %c0_6 = arith.constant 0 : index
    %c0_7 = arith.constant 0 : index
    %10 = vector.load %arg9[%c0_6, %c0_7] : memref<16x128xbf16, #tpu.memory_space<vmem>>, vector<16x128xbf16>
    tpu.vector_store %arg9[%c0_6, %c0_7], %9 {strides = array<i32>} : memref<16x128xbf16, #tpu.memory_space<vmem>>, vector<16x128xbf16>,
    return
  }
  func.func @transform_0(%arg0: i32, %arg1: i32) -> (i32, i32) {
    %c0_i32 = arith.constant 0 : i32
    %c0_i32_0 = arith.constant 0 : i32
    return %arg0, %c0_i32 : i32, i32
  }
  func.func @transform_1(%arg0: i32, %arg1: i32) -> (i32, i32) {
    %c0_i32 = arith.constant 0 : i32
    %c0_i32_0 = arith.constant 0 : i32
    %c0_i32_1 = arith.constant 0 : i32
    return %c0_i32, %c0_i32_0 : i32, i32
  }
  func.func @transform_2(%arg0: i32, %arg1: i32) -> (i32, i32) {
    %c0_i32 = arith.constant 0 : i32
    %c0_i32_0 = arith.constant 0 : i32
    %c0_i32_1 = arith.constant 0 : i32
    return %c0_i32, %c0_i32_0 : i32, i32
  }
  func.func @transform_3(%arg0: i32, %arg1: i32) -> (i32, i32) {
    %c0_i32 = arith.constant 0 : i32
    %c0_i32_0 = arith.constant 0 : i32
    %c0_i32_1 = arith.constant 0 : i32
    return %c0_i32, %c0_i32_0 : i32, i32
  }
  func.func @transform_4(%arg0: i32, %arg1: i32) -> (i32, i32) {
    %c0_i32 = arith.constant 0 : i32
    %c0_i32_0 = arith.constant 0 : i32
    %c0_i32_1 = arith.constant 0 : i32
    return %c0_i32, %c0_i32_0 : i32, i32
  }
  func.func @transform_5(%arg0: i32, %arg1: i32) -> (i32, i32) {
    %c0_i32 = arith.constant 0 : i32
    %c0_i32_0 = arith.constant 0 : i32
    return %c0_i32, %arg1 : i32, i32
  }
  func.func @transform_6(%arg0: i32, %arg1: i32) -> (i32, i32) {
    %c0_i32 = arith.constant 0 : i32
    %c0_i32_0 = arith.constant 0 : i32
    return %c0_i32, %arg1 : i32, i32
  }
  func.func @transform_7(%arg0: i32, %arg1: i32) -> (i32, i32) {
    %c0_i32 = arith.constant 0 : i32
    return %arg0, %arg1 : i32, i32
  }
}

module attributes {stable_mosaic.version = 11 : i64} {
  func.func @_head_kernel(%arg0: i32, %arg1: i32, %arg2: memref<16x32xbf16, #tpu.memory_space<vmem>>, %arg3: memref<32x32xbf16, #tpu.memory_space<vmem>>, %arg4: memref<1x32xf32, #tpu.memory_space<vmem>>, %arg5: memref<1x32xf32, #tpu.memory_space<vmem>>, %arg6: memref<1x32xf32, #tpu.memory_space<vmem>>, %arg7: memref<32x128xbf16, #tpu.memory_space<vmem>>, %arg8: memref<1x128xf32, #tpu.memory_space<vmem>>, %arg9: memref<16x128xbf16, #tpu.memory_space<vmem>>, %arg10: memref<16x32xbf16, #tpu.memory_space<vmem>>) attributes {dimension_semantics = [#tpu.dimension_semantics<parallel>, #tpu.dimension_semantics<arbitrary>], iteration_bounds = array<i64: 1, 1>, scalar_prefetch = 0 : i64, scratch_operands = 1 : i64, tpu.core_type = #tpu.core_type<tc>, window_params = [{transform_indices = @transform_0, window_bounds = array<i64: 16, 32>}, {pipeline_mode = #tpu.pipeline_mode<synchronous>, transform_indices = @transform_1, window_bounds = array<i64: 32, 32>}, {pipeline_mode = #tpu.pipeline_mode<synchronous>, transform_indices = @transform_2, window_bounds = array<i64: 1, 32>}, {pipeline_mode = #tpu.pipeline_mode<synchronous>, transform_indices = @transform_3, window_bounds = array<i64: 1, 32>}, {pipeline_mode = #tpu.pipeline_mode<synchronous>, transform_indices = @transform_4, window_bounds = array<i64: 1, 32>}, {transform_indices = @transform_5, window_bounds = array<i64: 32, 128>}, {transform_indices = @transform_6, window_bounds = array<i64: 1, 128>}, {transform_indices = @transform_7, window_bounds = array<i64: 16, 128>}]} {
    %c0_i32 = arith.constant 0 : i32
    %0 = arith.cmpi eq, %arg1, %c0_i32 : i32
    %1 = arith.extui %0 : i1 to i32
    %c0_i32_0 = arith.constant 0 : i32
    %2 = arith.cmpi ne, %1, %c0_i32_0 : i32
    scf.if %2 {
      %c0_8 = arith.constant 0 : index
      %c0_9 = arith.constant 0 : index
      %11 = vector.load %arg2[%c0_8, %c0_9] : memref<16x32xbf16, #tpu.memory_space<vmem>>, vector<16x32xbf16>
      %c0_10 = arith.constant 0 : index
      %c0_11 = arith.constant 0 : index
      %12 = vector.load %arg3[%c0_10, %c0_11] : memref<32x32xbf16, #tpu.memory_space<vmem>>, vector<32x32xbf16>
      %cst_12 = arith.constant dense<0.000000e+00> : vector<16x32xf32>
      %13 = tpu.matmul %11, %12, %cst_12 {dimension_numbers = #tpu.dot_dimension_numbers<[1], [0], [0], [1], [0, 0, 1, 1], [], []>} : vector<16x32xbf16>, vector<32x32xbf16>, vector<16x32xf32> -> vector<16x32xf32>
      %c0_13 = arith.constant 0 : index
      %c0_14 = arith.constant 0 : index
      %14 = vector.load %arg4[%c0_13, %c0_14] : memref<1x32xf32, #tpu.memory_space<vmem>>, vector<1x32xf32>
      %15 = vector.broadcast %14 : vector<1x32xf32> to vector<16x32xf32>
      %16 = arith.addf %13, %15 : vector<16x32xf32>
      %17 = arith.mulf %16, %16 : vector<16x32xf32>
      %18 = arith.mulf %16, %17 : vector<16x32xf32>
      %cst_15 = arith.constant 4.471500e-02 : f32
      %19 = vector.broadcast %cst_15 : f32 to vector<16x32xf32>
      %20 = arith.mulf %19, %18 : vector<16x32xf32>
      %21 = arith.addf %16, %20 : vector<16x32xf32>
      %cst_16 = arith.constant 0.797884583 : f32
      %22 = vector.broadcast %cst_16 : f32 to vector<16x32xf32>
      %23 = arith.mulf %22, %21 : vector<16x32xf32>
      %24 = math.tanh %23 : vector<16x32xf32>
      %cst_17 = arith.constant 1.000000e+00 : f32
      %25 = vector.broadcast %cst_17 : f32 to vector<16x32xf32>
      %26 = arith.addf %25, %24 : vector<16x32xf32>
      %cst_18 = arith.constant 5.000000e-01 : f32
      %27 = vector.broadcast %cst_18 : f32 to vector<16x32xf32>
      %28 = arith.mulf %27, %26 : vector<16x32xf32>
      %29 = arith.mulf %16, %28 : vector<16x32xf32>
      %cst_19 = arith.constant dense<0.000000e+00> : vector<16xf32>
      %30 = vector.multi_reduction <add>, %29, %cst_19 [1] : vector<16x32xf32> to vector<16xf32>
      %31 = vector.shape_cast %30 : vector<16xf32> to vector<16x1xf32>
      %cst_20 = arith.constant 3.200000e+01 : f32
      %32 = vector.broadcast %cst_20 : f32 to vector<16x1xf32>
      %33 = arith.divf %31, %32 : vector<16x1xf32>
      %34 = arith.mulf %29, %29 : vector<16x32xf32>
      %cst_21 = arith.constant dense<0.000000e+00> : vector<16xf32>
      %35 = vector.multi_reduction <add>, %34, %cst_21 [1] : vector<16x32xf32> to vector<16xf32>
      %36 = vector.shape_cast %35 : vector<16xf32> to vector<16x1xf32>
      %cst_22 = arith.constant 3.200000e+01 : f32
      %37 = vector.broadcast %cst_22 : f32 to vector<16x1xf32>
      %38 = arith.divf %36, %37 : vector<16x1xf32>
      %39 = arith.mulf %33, %33 : vector<16x1xf32>
      %40 = arith.subf %38, %39 : vector<16x1xf32>
      %cst_23 = arith.constant 0.000000e+00 : f32
      %41 = vector.broadcast %cst_23 : f32 to vector<16x1xf32>
      %42 = arith.maximumf %40, %41 : vector<16x1xf32>
      %43 = vector.broadcast %33 : vector<16x1xf32> to vector<16x32xf32>
      %44 = arith.subf %29, %43 : vector<16x32xf32>
      %cst_24 = arith.constant 9.99999996E-13 : f32
      %45 = vector.broadcast %cst_24 : f32 to vector<16x1xf32>
      %46 = arith.addf %42, %45 : vector<16x1xf32>
      %47 = math.rsqrt %46 : vector<16x1xf32>
      %48 = vector.broadcast %47 : vector<16x1xf32> to vector<16x32xf32>
      %49 = arith.mulf %44, %48 : vector<16x32xf32>
      %c0_25 = arith.constant 0 : index
      %c0_26 = arith.constant 0 : index
      %50 = vector.load %arg5[%c0_25, %c0_26] : memref<1x32xf32, #tpu.memory_space<vmem>>, vector<1x32xf32>
      %51 = vector.broadcast %50 : vector<1x32xf32> to vector<16x32xf32>
      %52 = arith.mulf %49, %51 : vector<16x32xf32>
      %c0_27 = arith.constant 0 : index
      %c0_28 = arith.constant 0 : index
      %53 = vector.load %arg6[%c0_27, %c0_28] : memref<1x32xf32, #tpu.memory_space<vmem>>, vector<1x32xf32>
      %54 = vector.broadcast %53 : vector<1x32xf32> to vector<16x32xf32>
      %55 = arith.addf %52, %54 : vector<16x32xf32>
      %56 = arith.truncf %55 : vector<16x32xf32> to vector<16x32xbf16>
      %c0_29 = arith.constant 0 : index
      %c0_30 = arith.constant 0 : index
      %57 = vector.load %arg10[%c0_29, %c0_30] : memref<16x32xbf16, #tpu.memory_space<vmem>>, vector<16x32xbf16>
      tpu.vector_store %arg10[%c0_29, %c0_30], %56 {strides = array<i32>} : memref<16x32xbf16, #tpu.memory_space<vmem>>, vector<16x32xbf16>,
    } else {
    }
    %c0 = arith.constant 0 : index
    %c0_1 = arith.constant 0 : index
    %3 = vector.load %arg10[%c0, %c0_1] : memref<16x32xbf16, #tpu.memory_space<vmem>>, vector<16x32xbf16>
    %c0_2 = arith.constant 0 : index
    %c0_3 = arith.constant 0 : index
    %4 = vector.load %arg7[%c0_2, %c0_3] : memref<32x128xbf16, #tpu.memory_space<vmem>>, vector<32x128xbf16>
    %cst = arith.constant dense<0.000000e+00> : vector<16x128xf32>
    %5 = tpu.matmul %3, %4, %cst {dimension_numbers = #tpu.dot_dimension_numbers<[1], [0], [0], [1], [0, 0, 1, 1], [], []>} : vector<16x32xbf16>, vector<32x128xbf16>, vector<16x128xf32> -> vector<16x128xf32>
    %c0_4 = arith.constant 0 : index
    %c0_5 = arith.constant 0 : index
    %6 = vector.load %arg8[%c0_4, %c0_5] : memref<1x128xf32, #tpu.memory_space<vmem>>, vector<1x128xf32>
    %7 = vector.broadcast %6 : vector<1x128xf32> to vector<16x128xf32>
    %8 = arith.addf %5, %7 : vector<16x128xf32>
    %9 = arith.truncf %8 : vector<16x128xf32> to vector<16x128xbf16>
    %c0_6 = arith.constant 0 : index
    %c0_7 = arith.constant 0 : index
    %10 = vector.load %arg9[%c0_6, %c0_7] : memref<16x128xbf16, #tpu.memory_space<vmem>>, vector<16x128xbf16>
    tpu.vector_store %arg9[%c0_6, %c0_7], %9 {strides = array<i32>} : memref<16x128xbf16, #tpu.memory_space<vmem>>, vector<16x128xbf16>,
    return
  }
  func.func @transform_0(%arg0: i32, %arg1: i32) -> (i32, i32) {
    %c0_i32 = arith.constant 0 : i32
    %c0_i32_0 = arith.constant 0 : i32
    return %arg0, %c0_i32 : i32, i32
  }
  func.func @transform_1(%arg0: i32, %arg1: i32) -> (i32, i32) {
    %c0_i32 = arith.constant 0 : i32
    %c0_i32_0 = arith.constant 0 : i32
    %c0_i32_1 = arith.constant 0 : i32
    return %c0_i32, %c0_i32_0 : i32, i32
  }
  func.func @transform_2(%arg0: i32, %arg1: i32) -> (i32, i32) {
    %c0_i32 = arith.constant 0 : i32
    %c0_i32_0 = arith.constant 0 : i32
    %c0_i32_1 = arith.constant 0 : i32
    return %c0_i32, %c0_i32_0 : i32, i32
  }
  func.func @transform_3(%arg0: i32, %arg1: i32) -> (i32, i32) {
    %c0_i32 = arith.constant 0 : i32
    %c0_i32_0 = arith.constant 0 : i32
    %c0_i32_1 = arith.constant 0 : i32
    return %c0_i32, %c0_i32_0 : i32, i32
  }
  func.func @transform_4(%arg0: i32, %arg1: i32) -> (i32, i32) {
    %c0_i32 = arith.constant 0 : i32
    %c0_i32_0 = arith.constant 0 : i32
    %c0_i32_1 = arith.constant 0 : i32
    return %c0_i32, %c0_i32_0 : i32, i32
  }
  func.func @transform_5(%arg0: i32, %arg1: i32) -> (i32, i32) {
    %c0_i32 = arith.constant 0 : i32
    %c0_i32_0 = arith.constant 0 : i32
    return %c0_i32, %arg1 : i32, i32
  }
  func.func @transform_6(%arg0: i32, %arg1: i32) -> (i32, i32) {
    %c0_i32 = arith.constant 0 : i32
    %c0_i32_0 = arith.constant 0 : i32
    return %c0_i32, %arg1 : i32, i32
  }
  func.func @transform_7(%arg0: i32, %arg1: i32) -> (i32, i32) {
    %c0_i32 = arith.constant 0 : i32
    return %arg0, %arg1 : i32, i32
  }
}

</mosaic_0001>

<llo_original>
// kernel: bert_image_prediction_head.1
$region0: #{bert_image_prediction_head.1}
  #allocation0 [shape = 'u32[]', space=smem, size = 0x4, offset = 0x4, fixed_abs, tag = 'smem constant byte address 0x4 - core index']
  #allocation1 [shape = 'u32[72,128]{1,0:T(1,128)}', space=vmem, size = 0x9000, scoped, tag = 'internal scratch']
  #allocation2 [shape = 'bf16[16,32]{1,0:T(8,128)(2,1)}', space=vmem, size = 0x1000, scoped, tag = 'scratch operand']
  %s0 = inlined_call_operand.vmem [shape: bf16[16,32], index: 0, kind: input, shape index: {}]
  %s1 = inlined_call_operand.vmem [shape: bf16[32,32], index: 1, kind: input, shape index: {}]
  %s2 = inlined_call_operand.vmem [shape: f32[1,32], index: 2, kind: input, shape index: {}]
  %s3 = inlined_call_operand.vmem [shape: f32[1,32], index: 3, kind: input, shape index: {}]
  %s4 = inlined_call_operand.vmem [shape: f32[1,32], index: 4, kind: input, shape index: {}]
  %s5 = inlined_call_operand.vmem [shape: bf16[32,128], index: 5, kind: input, shape index: {}]
  %s6 = inlined_call_operand.vmem [shape: f32[1,128], index: 6, kind: input, shape index: {}]
  %s7 = inlined_call_operand.vmem [shape: bf16[16,128], index: 7, kind: output, shape index: {}]
  %s8 = sld [smem:[#allocation0]]
  $region42: #{bert_image_prediction_head.1} parent=0
    _
  %s10 = ssub.s32 1, %s8
  %s11 = scalar_select 0, %s10, %s8
  // Predicated region
  $region2: #{bert_image_prediction_head.1} parent=0 // pred_check
    _
  $region3: #{bert_image_prediction_head.1} parent=0 // pred_check_branch
    %13 = sbr.rel (0) target = $region5
  $region4: #{bert_image_prediction_head.1} parent=0 // pred_region
    _
  $region5: #{bert_image_prediction_head.1} parent=0 // pred_fallthru
    _
  // Predicated region
  $region6: #{bert_image_prediction_head.1} parent=0 // pred_check
    _
  $region7: #{bert_image_prediction_head.1} parent=0 // pred_check_branch
    %15 = sbr.rel (0) target = $region9
  $region8: #{bert_image_prediction_head.1} parent=0 // pred_region
    _
  $region9: #{bert_image_prediction_head.1} parent=0 // pred_fallthru
    _
  // Predicated region
  $region10: #{bert_image_prediction_head.1} parent=0 // pred_check
    _
  $region11: #{bert_image_prediction_head.1} parent=0 // pred_check_branch
    %17 = sbr.rel (0) target = $region13
  $region12: #{bert_image_prediction_head.1} parent=0 // pred_region
    _
  $region13: #{bert_image_prediction_head.1} parent=0 // pred_fallthru
    _
  // Predicated region
  $region14: #{bert_image_prediction_head.1} parent=0 // pred_check
    _
  $region15: #{bert_image_prediction_head.1} parent=0 // pred_check_branch
    %19 = sbr.rel (0) target = $region17
  $region16: #{bert_image_prediction_head.1} parent=0 // pred_region
    _
  $region17: #{bert_image_prediction_head.1} parent=0 // pred_fallthru
    _
  // Predicated region
  $region18: #{bert_image_prediction_head.1} parent=0 // pred_check
    _
  $region19: #{bert_image_prediction_head.1} parent=0 // pred_check_branch
    %21 = sbr.rel (0) target = $region21
  $region20: #{bert_image_prediction_head.1} parent=0 // pred_region
    _
  $region21: #{bert_image_prediction_head.1} parent=0 // pred_fallthru
    _
  // Predicated region
  $region22: #{bert_image_prediction_head.1} parent=0 // pred_check
    _
  $region23: #{bert_image_prediction_head.1} parent=0 // pred_check_branch
    %23 = sbr.rel (0) target = $region25
  $region24: #{bert_image_prediction_head.1} parent=0 // pred_region
    _
  $region25: #{bert_image_prediction_head.1} parent=0 // pred_fallthru
    _
  // Predicated region
  $region26: #{bert_image_prediction_head.1} parent=0 // pred_check
    _
  $region27: #{bert_image_prediction_head.1} parent=0 // pred_check_branch
    %25 = sbr.rel (0) target = $region29
  $region28: #{bert_image_prediction_head.1} parent=0 // pred_region
    _
  $region29: #{bert_image_prediction_head.1} parent=0 // pred_fallthru
    _
  %p27 = scmp.eq.s32.totalorder 0, 0
  // Predicated region
  $region30: #{bert_image_prediction_head.1} parent=0 // pred_check
    %p28 = pneg %p27
  $region31: #{bert_image_prediction_head.1} parent=0 // pred_check_branch
    %30 = sbr.rel (%p28) target = $region33
  $region32: #{bert_image_prediction_head.1} parent=0 // pred_region
    %v31 = vld [vmem:[%s0] sm:$0xf]
    %v32 = vld [vmem:[%s0 + $0x4] sm:$0xf]
    %v33 = vld [vmem:[%s1] sm:$0xf]
    %v34 = vld [vmem:[%s1 + $0x4] sm:$0xf]
    %v35 = vld [vmem:[%s1 + $0x8] sm:$0xf]
    %v36 = vld [vmem:[%s1 + $0xc] sm:$0xf]
    %v37 = vld [vmem:[%s2] sm:$0x1]
    %v39 = vperm.slane %v37, 0
    %v43 = vunpack.c.l.b16 %v31
    %v44 = vunpack.c.l.b16 %v32
    %v45 = vpack.c.b16 %v44, %v43
    %v50 = vunpack.c.l.b16 %v33
    %v51 = vunpack.c.l.b16 %v34
    %v52 = vunpack.c.l.b16 %v35
    %v53 = vunpack.c.l.b16 %v36
    %v54 = vpack.c.b16 %v51, %v50
    %v55 = vpack.c.b16 %v53, %v52
    %vm58 = vcmask 261120
    %v60 = vsel %vm58, %v45, 0
    %62 = vmatpush.bf16.msra.mxu0 0
    %63 = vmatpush.bf16.msra.mxu0 0
    %64 = vmatpush.bf16.msra.mxu0 0
    %65 = vmatpush.bf16.msra.mxu0 0
    %66 = vmatpush.bf16.msra.mxu0 0
    %67 = vmatpush.bf16.msra.mxu0 0
    %68 = vmatpush.bf16.msra.mxu0 %v55
    %69 = vmatpush.bf16.msra.mxu0 %v54
    %70 = vmatmul.bf16.gmra.mxu0 %v60
    %v71 = vpop.f32.mrf.mxu0
    %v72 = vadd.f32 %v39, %v71
    %v73 = vpop.f32.mrf.mxu0
    %v74 = vadd.f32 %v39, %v73
    %75 = vdwg.mxu0
    %v76 = vmul.f32 %v72, %v72
    %v77 = vmul.f32 %v74, %v74
    %v78 = vmul.f32 %v72, %v76
    %v79 = vmul.f32 %v74, %v77
    %v80 = vmul.f32 %v78, 0.044715
    %v81 = vmul.f32 %v79, 0.044715
    %v82 = vadd.f32 %v72, %v80
    %v83 = vadd.f32 %v74, %v81
    %v84 = vmul.f32 %v82, 0.7978846
    %v85 = vmul.f32 %v83, 0.7978846
    %v86 = vtanh.pop %v84
    %v87 = vtanh.pop %v85
    %v88 = vadd.f32 %v86, 1.0
    %v89 = vadd.f32 %v87, 1.0
    %v90 = vmul.f32 %v88, 0.5
    %v91 = vmul.f32 %v89, 0.5
    %v92 = vmul.f32 %v72, %v90
    %v93 = vmul.f32 %v74, %v91
    %v94 = vsel %vm58, %v92, 0.0
    %95 = vadd.xlane.f32.xlu0 %v94
    %v96 = vpop.xlane.xlu0 %95
    %v97 = vsel %vm58, %v93, 0.0
    %98 = vadd.xlane.f32.xlu0 %v97
    %v99 = vpop.xlane.xlu0 %98
    %v100 = vrcp.pop 32.0
    %v101 = vmul.f32 32.0, %v100
    %v102 = vsub.f32 1.0, %v101
    %v103 = vmul.f32 %v100, %v102
    %v104 = vadd.f32 %v100, %v103
    %vm105 = vweird.f32 %v100
    %v106 = vsel %vm105, %v100, %v104
    %v107 = vmul.f32 %v96, %v106
    %v108 = vmul.f32 %v99, %v106
    %v109 = vmul.f32 %v92, %v92
    %v110 = vmul.f32 %v93, %v93
    %v111 = vsel %vm58, %v109, 0.0
    %112 = vadd.xlane.f32.xlu0 %v111
    %v113 = vpop.xlane.xlu0 %112
    %v114 = vsel %vm58, %v110, 0.0
    %115 = vadd.xlane.f32.xlu0 %v114
    %v116 = vpop.xlane.xlu0 %115
    %v117 = vmul.f32 %v113, %v106
    %v118 = vmul.f32 %v116, %v106
    %v119 = vmul.f32 %v107, %v107
    %v120 = vmul.f32 %v108, %v108
    %v121 = vsub.f32 %v117, %v119
    %v122 = vsub.f32 %v118, %v120
    %v123 = vmax.f32 %v121, 0.0
    %v124 = vmax.f32 %v122, 0.0
    %v125 = vsub.f32 %v92, %v107
    %v126 = vsub.f32 %v93, %v108
    %v127 = vadd.f32 %v123, 1e-12
    %v128 = vadd.f32 %v124, 1e-12
    %v129 = vrsqrt.pop %v127
    %v130 = vmul.f32 %v129, %v127
    %v131 = vmul.f32 %v130, %v129
    %v132 = vmul.f32 0.5, %v131
    %v133 = vsub.f32 1.5, %v132
    %v134 = vmul.f32 %v129, %v133
    %vm135 = vweird.f32 %v127
    %vm136 = vweird.f32 %v129
    %vm137 = vmor %vm135, %vm136
    %v138 = vsel %vm137, %v129, %v134
    %v139 = vrsqrt.pop %v128
    %v140 = vmul.f32 %v139, %v128
    %v141 = vmul.f32 %v140, %v139
    %v142 = vmul.f32 0.5, %v141
    %v143 = vsub.f32 1.5, %v142
    %v144 = vmul.f32 %v139, %v143
    %vm145 = vweird.f32 %v128
    %vm146 = vweird.f32 %v139
    %vm147 = vmor %vm145, %vm146
    %v148 = vsel %vm147, %v139, %v144
    %v149 = vmul.f32 %v125, %v138
    %v150 = vmul.f32 %v126, %v148
    %v151 = vld [vmem:[%s3] sm:$0x1]
    %v153 = vperm.slane %v151, 0
    %v155 = vmul.f32 %v149, %v153
    %v156 = vmul.f32 %v150, %v153
    %v157 = vld [vmem:[%s4] sm:$0x1]
    %v159 = vperm.slane %v157, 0
    %v161 = vadd.f32 %v155, %v159
    %v162 = vadd.f32 %v156, %v159
    %v163 = vpack.c.bf16 %v161, %v161
    %v164 = vpack.c.bf16 %v162, %v162
    %vm165 = vcmask 257024
    %166 = vst.msk [vmem:[#allocation2] sm:$0xf] %vm165, %v163
    %167 = vst.msk [vmem:[#allocation2 + $0x4] sm:$0xf] %vm165, %v164
  $region33: #{bert_image_prediction_head.1} parent=0 // pred_fallthru
    _
  %v168 = vld [vmem:[#allocation2] sm:$0xf]
  %v169 = vld [vmem:[#allocation2 + $0x4] sm:$0xf]
  %v170 = vld [vmem:[%s5] sm:$0xf]
  %v171 = vld [vmem:[%s5 + $0x4] sm:$0xf]
  %v172 = vld [vmem:[%s5 + $0x8] sm:$0xf]
  %v173 = vld [vmem:[%s5 + $0xc] sm:$0xf]
  %v174 = vld [vmem:[%s6] sm:$0x1]
  %v176 = vperm.slane %v174, 0
  %v180 = vunpack.c.l.b16 %v168
  %v181 = vunpack.c.l.b16 %v169
  %v182 = vpack.c.b16 %v181, %v180
  %v187 = vunpack.c.l.b16 %v170
  %v188 = vunpack.c.l.b16 %v171
  %v189 = vunpack.c.l.b16 %v172
  %v190 = vunpack.c.l.b16 %v173
  %v191 = vpack.c.b16 %v188, %v187
  %v192 = vpack.c.b16 %v190, %v189
  %vm195 = vcmask 261120
  %v197 = vsel %vm195, %v182, 0
  %199 = vmatpush.bf16.msra.mxu0 0
  %200 = vmatpush.bf16.msra.mxu0 0
  %201 = vmatpush.bf16.msra.mxu0 0
  %202 = vmatpush.bf16.msra.mxu0 0
  %203 = vmatpush.bf16.msra.mxu0 0
  %204 = vmatpush.bf16.msra.mxu0 0
  %205 = vmatpush.bf16.msra.mxu0 %v192
  %206 = vmatpush.bf16.msra.mxu0 %v191
  %207 = vmatmul.bf16.gmra.mxu0 %v197
  %v208 = vpop.f32.mrf.mxu0
  %v209 = vadd.f32 %v176, %v208
  %v210 = vpop.f32.mrf.mxu0
  %v211 = vadd.f32 %v176, %v210
  %212 = vdwg.mxu0
  %v213 = vpack.c.bf16 %v209, %v209
  %v214 = vpack.c.bf16 %v211, %v211
  %215 = vst [vmem:[%s7] sm:$0xf] %v213
  %216 = vst [vmem:[%s7 + $0x4] sm:$0xf] %v214
  // Predicated region
  $region34: #{bert_image_prediction_head.1} parent=0 // pred_check
    _
  $region35: #{bert_image_prediction_head.1} parent=0 // pred_check_branch
    %218 = sbr.rel (0) target = $region37
  $region36: #{bert_image_prediction_head.1} parent=0 // pred_region
    _
  $region37: #{bert_image_prediction_head.1} parent=0 // pred_fallthru
    _
  // Predicated region
  $region38: #{bert_image_prediction_head.1} parent=0 // pred_check
    _
  $region39: #{bert_image_prediction_head.1} parent=0 // pred_check_branch
    %220 = sbr.rel (0) target = $region41
  $region40: #{bert_image_prediction_head.1} parent=0 // pred_region
    _
  $region41: #{bert_image_prediction_head.1} parent=0 // pred_fallthru
    _

// kernel: bert_image_prediction_head.1
$region0: #{bert_image_prediction_head.1}
  #allocation0 [shape = 'u32[]', space=smem, size = 0x4, offset = 0x4, fixed_abs, tag = 'smem constant byte address 0x4 - core index']
  #allocation1 [shape = 'u32[72,128]{1,0:T(1,128)}', space=vmem, size = 0x9000, scoped, tag = 'internal scratch']
  #allocation2 [shape = 'bf16[16,32]{1,0:T(8,128)(2,1)}', space=vmem, size = 0x1000, scoped, tag = 'scratch operand']
  %s0 = inlined_call_operand.vmem [shape: bf16[16,32], index: 0, kind: input, shape index: {}]
  %s1 = inlined_call_operand.vmem [shape: bf16[32,32], index: 1, kind: input, shape index: {}]
  %s2 = inlined_call_operand.vmem [shape: f32[1,32], index: 2, kind: input, shape index: {}]
  %s3 = inlined_call_operand.vmem [shape: f32[1,32], index: 3, kind: input, shape index: {}]
  %s4 = inlined_call_operand.vmem [shape: f32[1,32], index: 4, kind: input, shape index: {}]
  %s5 = inlined_call_operand.vmem [shape: bf16[32,128], index: 5, kind: input, shape index: {}]
  %s6 = inlined_call_operand.vmem [shape: f32[1,128], index: 6, kind: input, shape index: {}]
  %s7 = inlined_call_operand.vmem [shape: bf16[16,128], index: 7, kind: output, shape index: {}]
  %s8 = sld [smem:[#allocation0]]
  $region42: #{bert_image_prediction_head.1} parent=0
    _
  %s10 = ssub.s32 1, %s8
  %s11 = scalar_select 0, %s10, %s8
  // Predicated region
  $region2: #{bert_image_prediction_head.1} parent=0 // pred_check
    _
  $region3: #{bert_image_prediction_head.1} parent=0 // pred_check_branch
    %13 = sbr.rel (0) target = $region5
  $region4: #{bert_image_prediction_head.1} parent=0 // pred_region
    _
  $region5: #{bert_image_prediction_head.1} parent=0 // pred_fallthru
    _
  // Predicated region
  $region6: #{bert_image_prediction_head.1} parent=0 // pred_check
    _
  $region7: #{bert_image_prediction_head.1} parent=0 // pred_check_branch
    %15 = sbr.rel (0) target = $region9
  $region8: #{bert_image_prediction_head.1} parent=0 // pred_region
    _
  $region9: #{bert_image_prediction_head.1} parent=0 // pred_fallthru
    _
  // Predicated region
  $region10: #{bert_image_prediction_head.1} parent=0 // pred_check
    _
  $region11: #{bert_image_prediction_head.1} parent=0 // pred_check_branch
    %17 = sbr.rel (0) target = $region13
  $region12: #{bert_image_prediction_head.1} parent=0 // pred_region
    _
  $region13: #{bert_image_prediction_head.1} parent=0 // pred_fallthru
    _
  // Predicated region
  $region14: #{bert_image_prediction_head.1} parent=0 // pred_check
    _
  $region15: #{bert_image_prediction_head.1} parent=0 // pred_check_branch
    %19 = sbr.rel (0) target = $region17
  $region16: #{bert_image_prediction_head.1} parent=0 // pred_region
    _
  $region17: #{bert_image_prediction_head.1} parent=0 // pred_fallthru
    _
  // Predicated region
  $region18: #{bert_image_prediction_head.1} parent=0 // pred_check
    _
  $region19: #{bert_image_prediction_head.1} parent=0 // pred_check_branch
    %21 = sbr.rel (0) target = $region21
  $region20: #{bert_image_prediction_head.1} parent=0 // pred_region
    _
  $region21: #{bert_image_prediction_head.1} parent=0 // pred_fallthru
    _
  // Predicated region
  $region22: #{bert_image_prediction_head.1} parent=0 // pred_check
    _
  $region23: #{bert_image_prediction_head.1} parent=0 // pred_check_branch
    %23 = sbr.rel (0) target = $region25
  $region24: #{bert_image_prediction_head.1} parent=0 // pred_region
    _
  $region25: #{bert_image_prediction_head.1} parent=0 // pred_fallthru
    _
  // Predicated region
  $region26: #{bert_image_prediction_head.1} parent=0 // pred_check
    _
  $region27: #{bert_image_prediction_head.1} parent=0 // pred_check_branch
    %25 = sbr.rel (0) target = $region29
  $region28: #{bert_image_prediction_head.1} parent=0 // pred_region
    _
  $region29: #{bert_image_prediction_head.1} parent=0 // pred_fallthru
    _
  %p27 = scmp.eq.s32.totalorder 0, 0
  // Predicated region
  $region30: #{bert_image_prediction_head.1} parent=0 // pred_check
    %p28 = pneg %p27
  $region31: #{bert_image_prediction_head.1} parent=0 // pred_check_branch
    %30 = sbr.rel (%p28) target = $region33
  $region32: #{bert_image_prediction_head.1} parent=0 // pred_region
    %v31 = vld [vmem:[%s0] sm:$0xf]
    %v32 = vld [vmem:[%s0 + $0x4] sm:$0xf]
    %v33 = vld [vmem:[%s1] sm:$0xf]
    %v34 = vld [vmem:[%s1 + $0x4] sm:$0xf]
    %v35 = vld [vmem:[%s1 + $0x8] sm:$0xf]
    %v36 = vld [vmem:[%s1 + $0xc] sm:$0xf]
    %v37 = vld [vmem:[%s2] sm:$0x1]
    %v39 = vperm.slane %v37, 0
    %v43 = vunpack.c.l.b16 %v31
    %v44 = vunpack.c.l.b16 %v32
    %v45 = vpack.c.b16 %v44, %v43
    %v50 = vunpack.c.l.b16 %v33
    %v51 = vunpack.c.l.b16 %v34
    %v52 = vunpack.c.l.b16 %v35
    %v53 = vunpack.c.l.b16 %v36
    %v54 = vpack.c.b16 %v51, %v50
    %v55 = vpack.c.b16 %v53, %v52
    %vm58 = vcmask 261120
    %v60 = vsel %vm58, %v45, 0
    %62 = vmatpush.bf16.msra.mxu0 0
    %63 = vmatpush.bf16.msra.mxu0 0
    %64 = vmatpush.bf16.msra.mxu0 0
    %65 = vmatpush.bf16.msra.mxu0 0
    %66 = vmatpush.bf16.msra.mxu0 0
    %67 = vmatpush.bf16.msra.mxu0 0
    %68 = vmatpush.bf16.msra.mxu0 %v55
    %69 = vmatpush.bf16.msra.mxu0 %v54
    %70 = vmatmul.bf16.gmra.mxu0 %v60
    %v71 = vpop.f32.mrf.mxu0
    %v72 = vadd.f32 %v39, %v71
    %v73 = vpop.f32.mrf.mxu0
    %v74 = vadd.f32 %v39, %v73
    %75 = vdwg.mxu0
    %v76 = vmul.f32 %v72, %v72
    %v77 = vmul.f32 %v74, %v74
    %v78 = vmul.f32 %v72, %v76
    %v79 = vmul.f32 %v74, %v77
    %v80 = vmul.f32 %v78, 0.044715
    %v81 = vmul.f32 %v79, 0.044715
    %v82 = vadd.f32 %v72, %v80
    %v83 = vadd.f32 %v74, %v81
    %v84 = vmul.f32 %v82, 0.7978846
    %v85 = vmul.f32 %v83, 0.7978846
    %v86 = vtanh.pop %v84
    %v87 = vtanh.pop %v85
    %v88 = vadd.f32 %v86, 1.0
    %v89 = vadd.f32 %v87, 1.0
    %v90 = vmul.f32 %v88, 0.5
    %v91 = vmul.f32 %v89, 0.5
    %v92 = vmul.f32 %v72, %v90
    %v93 = vmul.f32 %v74, %v91
    %v94 = vsel %vm58, %v92, 0.0
    %95 = vadd.xlane.f32.xlu0 %v94
    %v96 = vpop.xlane.xlu0 %95
    %v97 = vsel %vm58, %v93, 0.0
    %98 = vadd.xlane.f32.xlu0 %v97
    %v99 = vpop.xlane.xlu0 %98
    %v100 = vrcp.pop 32.0
    %v101 = vmul.f32 32.0, %v100
    %v102 = vsub.f32 1.0, %v101
    %v103 = vmul.f32 %v100, %v102
    %v104 = vadd.f32 %v100, %v103
    %vm105 = vweird.f32 %v100
    %v106 = vsel %vm105, %v100, %v104
    %v107 = vmul.f32 %v96, %v106
    %v108 = vmul.f32 %v99, %v106
    %v109 = vmul.f32 %v92, %v92
    %v110 = vmul.f32 %v93, %v93
    %v111 = vsel %vm58, %v109, 0.0
    %112 = vadd.xlane.f32.xlu0 %v111
    %v113 = vpop.xlane.xlu0 %112
    %v114 = vsel %vm58, %v110, 0.0
    %115 = vadd.xlane.f32.xlu0 %v114
    %v116 = vpop.xlane.xlu0 %115
    %v117 = vmul.f32 %v113, %v106
    %v118 = vmul.f32 %v116, %v106
    %v119 = vmul.f32 %v107, %v107
    %v120 = vmul.f32 %v108, %v108
    %v121 = vsub.f32 %v117, %v119
    %v122 = vsub.f32 %v118, %v120
    %v123 = vmax.f32 %v121, 0.0
    %v124 = vmax.f32 %v122, 0.0
    %v125 = vsub.f32 %v92, %v107
    %v126 = vsub.f32 %v93, %v108
    %v127 = vadd.f32 %v123, 1e-12
    %v128 = vadd.f32 %v124, 1e-12
    %v129 = vrsqrt.pop %v127
    %v130 = vmul.f32 %v129, %v127
    %v131 = vmul.f32 %v130, %v129
    %v132 = vmul.f32 0.5, %v131
    %v133 = vsub.f32 1.5, %v132
    %v134 = vmul.f32 %v129, %v133
    %vm135 = vweird.f32 %v127
    %vm136 = vweird.f32 %v129
    %vm137 = vmor %vm135, %vm136
    %v138 = vsel %vm137, %v129, %v134
    %v139 = vrsqrt.pop %v128
    %v140 = vmul.f32 %v139, %v128
    %v141 = vmul.f32 %v140, %v139
    %v142 = vmul.f32 0.5, %v141
    %v143 = vsub.f32 1.5, %v142
    %v144 = vmul.f32 %v139, %v143
    %vm145 = vweird.f32 %v128
    %vm146 = vweird.f32 %v139
    %vm147 = vmor %vm145, %vm146
    %v148 = vsel %vm147, %v139, %v144
    %v149 = vmul.f32 %v125, %v138
    %v150 = vmul.f32 %v126, %v148
    %v151 = vld [vmem:[%s3] sm:$0x1]
    %v153 = vperm.slane %v151, 0
    %v155 = vmul.f32 %v149, %v153
    %v156 = vmul.f32 %v150, %v153
    %v157 = vld [vmem:[%s4] sm:$0x1]
    %v159 = vperm.slane %v157, 0
    %v161 = vadd.f32 %v155, %v159
    %v162 = vadd.f32 %v156, %v159
    %v163 = vpack.c.bf16 %v161, %v161
    %v164 = vpack.c.bf16 %v162, %v162
    %vm165 = vcmask 257024
    %166 = vst.msk [vmem:[#allocation2] sm:$0xf] %vm165, %v163
    %167 = vst.msk [vmem:[#allocation2 + $0x4] sm:$0xf] %vm165, %v164
  $region33: #{bert_image_prediction_head.1} parent=0 // pred_fallthru
    _
  %v168 = vld [vmem:[#allocation2] sm:$0xf]
  %v169 = vld [vmem:[#allocation2 + $0x4] sm:$0xf]
  %v170 = vld [vmem:[%s5] sm:$0xf]
  %v171 = vld [vmem:[%s5 + $0x4] sm:$0xf]
  %v172 = vld [vmem:[%s5 + $0x8] sm:$0xf]
  %v173 = vld [vmem:[%s5 + $0xc] sm:$0xf]
  %v174 = vld [vmem:[%s6] sm:$0x1]
  %v176 = vperm.slane %v174, 0
  %v180 = vunpack.c.l.b16 %v168
  %v181 = vunpack.c.l.b16 %v169
  %v182 = vpack.c.b16 %v181, %v180
  %v187 = vunpack.c.l.b16 %v170
  %v188 = vunpack.c.l.b16 %v171
  %v189 = vunpack.c.l.b16 %v172
  %v190 = vunpack.c.l.b16 %v173
  %v191 = vpack.c.b16 %v188, %v187
  %v192 = vpack.c.b16 %v190, %v189
  %vm195 = vcmask 261120
  %v197 = vsel %vm195, %v182, 0
  %199 = vmatpush.bf16.msra.mxu0 0
  %200 = vmatpush.bf16.msra.mxu0 0
  %201 = vmatpush.bf16.msra.mxu0 0
  %202 = vmatpush.bf16.msra.mxu0 0
  %203 = vmatpush.bf16.msra.mxu0 0
  %204 = vmatpush.bf16.msra.mxu0 0
  %205 = vmatpush.bf16.msra.mxu0 %v192
  %206 = vmatpush.bf16.msra.mxu0 %v191
  %207 = vmatmul.bf16.gmra.mxu0 %v197
  %v208 = vpop.f32.mrf.mxu0
  %v209 = vadd.f32 %v176, %v208
  %v210 = vpop.f32.mrf.mxu0
  %v211 = vadd.f32 %v176, %v210
  %212 = vdwg.mxu0
  %v213 = vpack.c.bf16 %v209, %v209
  %v214 = vpack.c.bf16 %v211, %v211
  %215 = vst [vmem:[%s7] sm:$0xf] %v213
  %216 = vst [vmem:[%s7 + $0x4] sm:$0xf] %v214
  // Predicated region
  $region34: #{bert_image_prediction_head.1} parent=0 // pred_check
    _
  $region35: #{bert_image_prediction_head.1} parent=0 // pred_check_branch
    %218 = sbr.rel (0) target = $region37
  $region36: #{bert_image_prediction_head.1} parent=0 // pred_region
    _
  $region37: #{bert_image_prediction_head.1} parent=0 // pred_fallthru
    _
  // Predicated region
  $region38: #{bert_image_prediction_head.1} parent=0 // pred_check
    _
  $region39: #{bert_image_prediction_head.1} parent=0 // pred_check_branch
    %220 = sbr.rel (0) target = $region41
  $region40: #{bert_image_prediction_head.1} parent=0 // pred_region
    _
  $region41: #{bert_image_prediction_head.1} parent=0 // pred_fallthru
    _

</llo_original>
